<compile_context>
chip_gen: v7x
topology: tpu7x:2x2x1
jax: 0.10.0
libtpu: 0.0.40
codegen_flags: <defaults>
</compile_context>

<pallas_src>
import jax
import jax.numpy as jnp
from jax.experimental import pallas as pl
from jax.experimental.pallas import tpu as pltpu


_LANE = 128                       # pad vocab (last) axis to a multiple of this
_NEG = -1e30                      # vocab padding value: exp() underflows to exactly 0
_SMALL_BYPASS_BYTES = 256 * 1024  # below this many f32 bytes, use XLA's fused softmax


# ---------------------------------------------------------------------------
# Pallas kernels: row-wise softmax / log_softmax over the last dimension.
# ---------------------------------------------------------------------------
def _log_softmax_kernel(x_ref, o_ref):
    x = x_ref[...].astype(jnp.float32)                  # torch `.float()`
    m = jnp.max(x, axis=-1, keepdims=True)
    s = x - m
    lse = jnp.log(jnp.sum(jnp.exp(s), axis=-1, keepdims=True))
    o_ref[...] = s - lse


def _softmax_kernel(x_ref, o_ref):
    x = x_ref[...].astype(jnp.float32)                  # torch `.float()`
    m = jnp.max(x, axis=-1, keepdims=True)
    e = jnp.exp(x - m)
    denom = jnp.sum(e, axis=-1, keepdims=True)
    # EUP reciprocal + multiply instead of a VPU divide (exact, approx=False).
    o_ref[...] = e * pl.reciprocal(denom, approx=False)


# ---------------------------------------------------------------------------
# Tiling helpers.
# ---------------------------------------------------------------------------
def _round_up(x, m):
    return ((x + m - 1) // m) * m


def _vmem_capacity_bytes():
    try:
        return int(getattr(pltpu.get_tpu_info(), "vmem_capacity_bytes", 64 << 20))
    except Exception:
        return 64 << 20  # conservative (v7x-sized) fallback


def _choose_row_tile(rows, v_pad, in_itemsize):
    """Largest sublane-aligned row tile whose double-buffered in+out fits VMEM."""
    out_itemsize = 4                                 # output is always f32
    gran = max(8, 32 // in_itemsize)                 # 8 (f32) / 16 (bf16) / 32 (int8)
    rows_ceil = _round_up(rows, gran)

    vmem_cap = _vmem_capacity_bytes()
    # ~51 MiB budget on 128 MiB chips (v5e/v6e), ~25 MiB on v7x (64 MiB VMEM).
    budget = int(vmem_cap * 0.4)
    per_row = 2 * (in_itemsize + out_itemsize) * v_pad   # double-buffered input + output
    tile = max(gran, (budget // per_row) // gran * gran)
    tile = min(tile, 512)                            # throughput plateaus around 512 rows
    tile = min(tile, rows_ceil)
    # keep at least ~4 grid steps when there is enough work (pipelining + v7x megacore)
    if rows_ceil >= 4 * gran:
        tile = min(tile, max(gran, (rows_ceil // 4) // gran * gran))

    needed = 2 * (in_itemsize + out_itemsize) * v_pad * tile
    vmem_limit = int(min(0.9 * vmem_cap, max(needed + (4 << 20), 32 << 20)))
    return tile, vmem_limit


def _normalize_rows(x2d, log_probs):
    """(log_)softmax over the last axis of a (rows, vocab) array, f32 output."""
    rows, vocab = x2d.shape

    # Tiny problems: kernel launch + single-tile DMA dwarfs the work.
    if rows * vocab * 4 < _SMALL_BYPASS_BYTES:
        fn = jax.nn.log_softmax if log_probs else jax.nn.softmax
        return fn(x2d.astype(jnp.float32), axis=-1)

    in_itemsize = jnp.dtype(x2d.dtype).itemsize
    v_pad = _round_up(vocab, _LANE)
    row_tile, vmem_limit = _choose_row_tile(rows, v_pad, in_itemsize)
    rows_pad = _round_up(rows, row_tile)

    xp = x2d
    if v_pad != vocab:
        # huge-negative padding -> exp() of padded lanes is exactly 0 in the sum
        xp = jnp.pad(xp, ((0, 0), (0, v_pad - vocab)), constant_values=_NEG)
    if rows_pad != rows:
        xp = jnp.pad(xp, ((0, rows_pad - rows), (0, 0)))  # zero rows; sliced off below

    kernel = _log_softmax_kernel if log_probs else _softmax_kernel
    # TODO(synk): output stays f32 to match torch's `.float()` contract; bf16 output
    # would halve write traffic on v5e if downstream tolerated it.
    out = pl.pallas_call(
        kernel,
        out_shape=jax.ShapeDtypeStruct((rows_pad, v_pad), jnp.float32),
        grid_spec=pltpu.PrefetchScalarGridSpec(
            num_scalar_prefetch=0,
            grid=(rows_pad // row_tile,),
            in_specs=[pl.BlockSpec((row_tile, v_pad), lambda i: (i, 0))],
            out_specs=pl.BlockSpec((row_tile, v_pad), lambda i: (i, 0)),
        ),
        compiler_params=pltpu.CompilerParams(
            dimension_semantics=("parallel",),
            vmem_limit_bytes=vmem_limit,
        ),
    )(xp)
    return out[:rows, :vocab]


# ---------------------------------------------------------------------------
# JAX/Pallas port of FakeEncoderModel.
# ---------------------------------------------------------------------------
class FakeEncoderModel:
    def __init__(self, encoder, net_out, target):
        self.net_out = net_out
        self.target = target
        if hasattr(encoder, "output_batch_first"):
            self.output_batch_first = encoder.output_batch_first

    def forward(self, **unused):
        # forward just echoes the stored net output (no compute)
        return self.net_out

    def get_targets(self, *unused):
        return self.target

    def get_normalized_probs(self, net_output, log_probs, sample=None):
        """Get normalized probabilities (or log probs) from a net's output."""
        encoder_out = net_output["ctc_out"]
        if isinstance(encoder_out, jnp.ndarray):
            t, b, v = encoder_out.shape
            probs2d = _normalize_rows(encoder_out.reshape(t * b, v), log_probs)
            probs = probs2d.reshape(t, b, v)
            # TODO(synk): torch attaches `.batch_first` on the returned tensor;
            # jax arrays are immutable so the attribute is not carried.
            return probs
        raise NotImplementedError


# ---------------------------------------------------------------------------
# Demo / smoke test
# ---------------------------------------------------------------------------
if __name__ == "__main__":
    key = jax.random.PRNGKey(0)
    k1, k2, k3 = jax.random.split(key, 3)

    class _Enc:  # minimal encoder stub carrying output_batch_first
        output_batch_first = False

    # --- kernel path: vocab not 128-aligned, rows not a multiple of the tile ---
    T, B, V = 60, 7, 187
    ctc_out = jax.random.normal(k1, (T, B, V), dtype=jnp.float32)
    target = jax.random.randint(k2, (B, T), 0, V, dtype=jnp.int32)
    net_out = {"ctc_out": ctc_out}
    model = FakeEncoderModel(_Enc(), net_out, target)

    assert model.forward() is net_out
    assert jnp.array_equal(model.get_targets(), target)

    logp = model.get_normalized_probs(net_out, log_probs=True)
    p = model.get_normalized_probs(net_out, log_probs=False)
    jax.block_until_ready((logp, p))

    ref_logp = jax.nn.log_softmax(ctc_out.astype(jnp.float32), axis=-1)
    ref_p = jax.nn.softmax(ctc_out.astype(jnp.float32), axis=-1)
    assert logp.shape == (T, B, V) and logp.dtype == jnp.float32
    assert p.shape == (T, B, V) and p.dtype == jnp.float32
    assert jnp.allclose(logp, ref_logp, atol=1e-5), "log_softmax mismatch"
    assert jnp.allclose(p, ref_p, atol=1e-5), "softmax mismatch"

    # --- tiny shape: dispatch bypasses Pallas (launch overhead > work) ---
    Ts, Bs, Vs = 8, 2, 32
    ctc_small = jax.random.normal(k3, (Ts, Bs, Vs), dtype=jnp.float32)
    small_net_out = {"ctc_out": ctc_small}
    model_s = FakeEncoderModel(_Enc(), small_net_out, target)
    logp_s = model_s.get_normalized_probs(small_net_out, log_probs=True)
    jax.block_until_ready(logp_s)
    assert jnp.allclose(logp_s, jax.nn.log_softmax(ctc_small.astype(jnp.float32), axis=-1),
                        atol=1e-5), "small-path log_softmax mismatch"

    print("KERNEL_OK")
</pallas_src>

<mosaic_0001>
module attributes {stable_mosaic.version = 11 : i64} {
  func.func @_log_softmax_kernel(%arg0: i32, %arg1: memref<104x256xf32, #tpu.memory_space<vmem>>, %arg2: memref<104x256xf32, #tpu.memory_space<vmem>>) attributes {dimension_semantics = [#tpu.dimension_semantics<parallel>], iteration_bounds = array<i64: 5>, scalar_prefetch = 0 : i64, scratch_operands = 0 : i64, tpu.core_type = #tpu.core_type<tc>, window_params = [{transform_indices = @transform_0, window_bounds = array<i64: 104, 256>}, {transform_indices = @transform_1, window_bounds = array<i64: 104, 256>}]} {
    %c0 = arith.constant 0 : index
    %c0_0 = arith.constant 0 : index
    %0 = vector.load %arg1[%c0, %c0_0] : memref<104x256xf32, #tpu.memory_space<vmem>>, vector<104x256xf32>
    %cst = arith.constant dense<0xFF800000> : vector<104xf32>
    %1 = vector.multi_reduction <maximumf>, %0, %cst [1] : vector<104x256xf32> to vector<104xf32>
    %2 = vector.shape_cast %1 : vector<104xf32> to vector<104x1xf32>
    %3 = vector.broadcast %2 : vector<104x1xf32> to vector<104x256xf32>
    %4 = arith.subf %0, %3 : vector<104x256xf32>
    %5 = math.exp %4 : vector<104x256xf32>
    %cst_1 = arith.constant dense<0.000000e+00> : vector<104xf32>
    %6 = vector.multi_reduction <add>, %5, %cst_1 [1] : vector<104x256xf32> to vector<104xf32>
    %7 = vector.shape_cast %6 : vector<104xf32> to vector<104x1xf32>
    %8 = math.log %7 : vector<104x1xf32>
    %9 = vector.broadcast %8 : vector<104x1xf32> to vector<104x256xf32>
    %10 = arith.subf %4, %9 : vector<104x256xf32>
    %c0_2 = arith.constant 0 : index
    %c0_3 = arith.constant 0 : index
    %11 = vector.load %arg2[%c0_2, %c0_3] : memref<104x256xf32, #tpu.memory_space<vmem>>, vector<104x256xf32>
    tpu.vector_store %arg2[%c0_2, %c0_3], %10 {strides = array<i32>} : memref<104x256xf32, #tpu.memory_space<vmem>>, vector<104x256xf32>,
    return
  }
  func.func @transform_0(%arg0: i32) -> (i32, i32) {
    %c0_i32 = arith.constant 0 : i32
    %c0_i32_0 = arith.constant 0 : i32
    return %arg0, %c0_i32 : i32, i32
  }
  func.func @transform_1(%arg0: i32) -> (i32, i32) {
    %c0_i32 = arith.constant 0 : i32
    %c0_i32_0 = arith.constant 0 : i32
    return %arg0, %c0_i32 : i32, i32
  }
}

</mosaic_0001>

<llo_original>
// kernel: tpu_custom_call.1
$region0: #{tpu_custom_call.1}
  #allocation0 [shape = 'u32[]', space=smem, size = 0x4, offset = 0x4, fixed_abs, tag = 'smem constant byte address 0x4 - core index']
  #allocation1 [shape = 'u32[144,128]{1,0:T(1,128)}', space=vmem, size = 0x12000, scoped, tag = 'internal scratch']
  %s0 = inlined_call_operand.hbm [shape: f32[520,256], index: 0, kind: input, shape index: {}]
  %s1 = inlined_call_operand.hbm [shape: f32[520,256], index: 1, kind: output, shape index: {}]
  %s2 = sld [smem:[#allocation0]]
  $region41: #{tpu_custom_call.1} parent=0
    _
  %s4 = ssub.s32 1, %s2
  %s5 = scalar_select 0, %s4, %s2
  $region1: #{tpu_custom_call.1} parent=0
    #allocation2 [shape = 'u8[212992]{0}', space=vmem, size = 0x34000, scoped, tag = 'input window, operand 0']
    #allocation3 [shape = 's32[2]{0}', space=sflag, size = 0x8, scoped, tag = 'scoped memory for tpu_custom_call.1']
    #allocation4 [shape = 's32[2]{0}', space=sflag, size = 0x8, scoped, tag = 'scoped memory for tpu_custom_call.1']
    #allocation5 [shape = 'u8[212992]{0}', space=vmem, size = 0x34000, scoped, tag = 'output window, operand 0']
    %6 = vsyncpa [#allocation3], 0
    %s7 = scalar_lea.sflag [#allocation3], 1
    %8 = vsyncpa %s7, 0
    %9 = vsyncpa [#allocation4], 0
    %s10 = scalar_lea.sflag [#allocation4], 1
    %11 = vsyncpa %s10, 0
    loop: start=0, step=1, limit=7
    $region2: #{tpu_custom_call.1} parent=1 // loop_pre_header
      _
    $region3: #{tpu_custom_call.1} parent=1 // loop_header
      %s13 = sphi 0, %s17
      %p14 = scmp.ge.s32.totalorder %s13, 7
      %s23 = sphi 0, %s25
      %s26 = sphi 0, %s23
      %s27 = sphi 0, %s26
      %s43 = sphi 0, %s27
      %s49 = sphi 0, %s51
      %s52 = sphi 0, %s49
      %s53 = sphi 0, %s52
      %s69 = sphi 0, %s53
    $region4: #{tpu_custom_call.1} parent=1 // loop_header_branch
      %16 = sbr.rel (%p14) target = $region8
    $region5: #{tpu_custom_call.1} parent=1 // loop_body
      %s18 = ssub.s32 %s13, 1
      %s19 = ssub.s32 %s13, 2
      %s20 = sadd.s32 %s13, 1
      %s21 = ssub.s32 %s13, %s20
      %p22 = scmp.eq.s32.totalorder %s21, 0
      %s24 = sadd.s32 %s23, 1
      %s25 = scalar_select %p22, %s23, %s24
      %p28 = pneg %p22
      %p29 = scmp.eq.s32.totalorder %s13, 4
      %p30 = por %p28, %p29
      %p31 = scmp.ne.s32.totalorder %s23, %s26
      %p32 = scmp.eq.s32.totalorder %s13, 0
      %p33 = por %p31, %p32
      %p34 = scmp.ne.s32.totalorder %s23, %s26
      %p35 = scmp.eq.s32.totalorder %s18, 4
      %p36 = por %p34, %p35
      %p37 = scmp.ne.s32.totalorder %s26, %s27
      %p38 = scmp.eq.s32.totalorder %s18, 0
      %p39 = por %p37, %p38
      %p40 = scmp.ne.s32.totalorder %s26, %s27
      %p41 = scmp.eq.s32.totalorder %s19, 4
      %p42 = por %p40, %p41
      %p44 = scmp.ne.s32.totalorder %s27, %s43
      %p45 = scmp.eq.s32.totalorder %s19, 0
      %p46 = por %p44, %p45
      %s47 = ssub.s32 %s13, %s20
      %p48 = scmp.eq.s32.totalorder %s47, 0
      %s50 = sadd.s32 %s49, 1
      %s51 = scalar_select %p48, %s49, %s50
      %p54 = pneg %p48
      %p55 = scmp.eq.s32.totalorder %s13, 4
      %p56 = por %p54, %p55
      %p57 = scmp.ne.s32.totalorder %s49, %s52
      %p58 = scmp.eq.s32.totalorder %s13, 0
      %p59 = por %p57, %p58
      %p60 = scmp.ne.s32.totalorder %s49, %s52
      %p61 = scmp.eq.s32.totalorder %s18, 4
      %p62 = por %p60, %p61
      %p63 = scmp.ne.s32.totalorder %s52, %s53
      %p64 = scmp.eq.s32.totalorder %s18, 0
      %p65 = por %p63, %p64
      %p66 = scmp.ne.s32.totalorder %s52, %s53
      %p67 = scmp.eq.s32.totalorder %s19, 4
      %p68 = por %p66, %p67
      %p70 = scmp.ne.s32.totalorder %s53, %s69
      %p71 = scmp.eq.s32.totalorder %s19, 0
      %p72 = por %p70, %p71
      %p73 = scmp.le.s32.totalorder 1, %s13
      %p74 = scmp.lt.s32.totalorder %s13, 6
      %p75 = pnand %p73, %p74
      %p76 = pneg %p75
      // Predicated region
      $region9: #{tpu_custom_call.1} parent=5 // pred_check
        _
      $region10: #{tpu_custom_call.1} parent=5 // pred_check_branch
        %78 = sbr.rel (%p75) target = $region12
      $region11: #{tpu_custom_call.1} parent=5 // pred_region
        %s79 = ssub.s32 %s13, 1
      $region12: #{tpu_custom_call.1} parent=5 // pred_fallthru
        _
      %p80 = scmp.lt.s32.totalorder %s13, 5
      // Predicated region
      $region13: #{tpu_custom_call.1} parent=5 // pred_check
        %p81 = pneg %p80
      $region14: #{tpu_custom_call.1} parent=5 // pred_check_branch
        %83 = sbr.rel (%p81) target = $region16
      $region15: #{tpu_custom_call.1} parent=5 // pred_region
        // Predicated region
        $region17: #{tpu_custom_call.1} parent=15 // pred_check
          %p84 = pneg %p33
        $region18: #{tpu_custom_call.1} parent=15 // pred_check_branch
          %86 = sbr.rel (%p84) target = $region20
        $region19: #{tpu_custom_call.1} parent=15 // pred_region
          %s87 = sand.u32 %s23, 1
          %s88 = scalar_lea.sflag [#allocation3], %s87
          %s89 = sand.u32 %s23, 1
          %s90 = smul.addr %s89, 208
          %s91 = scalar_lea.vmem [#allocation2], %s90
          %s92 = smul.u32 13, %s13
          %s94 = ssub.s32 3328, 3328
          %95 = vsyncadd %s88, %s94
          %s96 = smul.addr %s92, 2
          %s97 = smul.addr %s96, 128
          %s98 = scalar_lea.hbm %s0, %s97
          %s99 = sshll.u32 %s91, 4
          %s100 = int_to_ptr.vmem [resolvable:$true] %s99
          %105 = dma.hbm_to_vmem [thread:$0]  %s98, 3328, %s100, %s88, 256, 256, 16
        $region20: #{tpu_custom_call.1} parent=15 // pred_fallthru
          _
      $region16: #{tpu_custom_call.1} parent=5 // pred_fallthru
        _
      %p106 = scmp.le.s32.totalorder 1, %s13
      %p107 = scmp.lt.s32.totalorder %s13, 6
      %p108 = pnand %p106, %p107
      %p109 = pneg %p108
      // Predicated region
      $region21: #{tpu_custom_call.1} parent=5 // pred_check
        _
      $region22: #{tpu_custom_call.1} parent=5 // pred_check_branch
        %111 = sbr.rel (%p108) target = $region24
      $region23: #{tpu_custom_call.1} parent=5 // pred_region
        %s112 = ssub.s32 %s13, 1
        %s113 = sand.u32 %s26, 1
        %s114 = scalar_lea.sflag [#allocation3], %s113
        %s115 = sand.u32 %s26, 1
        %s116 = smul.addr %s115, 208
        %s117 = scalar_lea.vmem [#allocation2], %s116
        // Predicated region
        $region25: #{tpu_custom_call.1} parent=23 // pred_check
          %p118 = pneg %p39
        $region26: #{tpu_custom_call.1} parent=23 // pred_check_branch
          %120 = sbr.rel (%p118) target = $region28
        $region27: #{tpu_custom_call.1} parent=23 // pred_region
          %121 = dma.done %s114, 3328
        $region28: #{tpu_custom_call.1} parent=23 // pred_fallthru
          _
        %s122 = sand.u32 %s26, 1
        %s123 = scalar_lea.sflag [#allocation3], %s122
        %s124 = sand.u32 %s26, 1
        %s125 = smul.addr %s124, 208
        %s126 = scalar_lea.vmem [#allocation2], %s125
        %p127 = pneg %p39
        %p128 = pneg %p36
        %p129 = pneg %p65
        %p130 = pneg %p62
        %s131 = sand.u32 %s52, 1
        %s132 = scalar_lea.sflag [#allocation4], %s131
        %s133 = sand.u32 %s52, 1
        %s134 = smul.addr %s133, 208
        %s135 = scalar_lea.vmem [#allocation5], %s134
        %s136 = smul.u32 13, %s18
        %s137 = smul.u32 13, %s18
        %v138 = vld [vmem:[%s117] sm:$0xff]
        %v139 = vld [vmem:[%s117 + $0x8] sm:$0xff]
        %v140 = vld [vmem:[%s117 + $0x10] sm:$0xff]
        %v141 = vld [vmem:[%s117 + $0x18] sm:$0xff]
        %v142 = vld [vmem:[%s117 + $0x20] sm:$0xff]
        %v143 = vld [vmem:[%s117 + $0x28] sm:$0xff]
        %v144 = vld [vmem:[%s117 + $0x30] sm:$0xff]
        %v145 = vld [vmem:[%s117 + $0x38] sm:$0xff]
        %v146 = vld [vmem:[%s117 + $0x40] sm:$0xff]
        %v147 = vld [vmem:[%s117 + $0x48] sm:$0xff]
        %v148 = vld [vmem:[%s117 + $0x50] sm:$0xff]
        %v149 = vld [vmem:[%s117 + $0x58] sm:$0xff]
        %v150 = vld [vmem:[%s117 + $0x60] sm:$0xff]
        %v151 = vld [vmem:[%s117 + $0x68] sm:$0xff]
        %v152 = vld [vmem:[%s117 + $0x70] sm:$0xff]
        %v153 = vld [vmem:[%s117 + $0x78] sm:$0xff]
        %v154 = vld [vmem:[%s117 + $0x80] sm:$0xff]
        %v155 = vld [vmem:[%s117 + $0x88] sm:$0xff]
        %v156 = vld [vmem:[%s117 + $0x90] sm:$0xff]
        %v157 = vld [vmem:[%s117 + $0x98] sm:$0xff]
        %v158 = vld [vmem:[%s117 + $0xa0] sm:$0xff]
        %v159 = vld [vmem:[%s117 + $0xa8] sm:$0xff]
        %v160 = vld [vmem:[%s117 + $0xb0] sm:$0xff]
        %v161 = vld [vmem:[%s117 + $0xb8] sm:$0xff]
        %v162 = vld [vmem:[%s117 + $0xc0] sm:$0xff]
        %v163 = vld [vmem:[%s117 + $0xc8] sm:$0xff]
        %v164 = vmax.f32 %v138, %v139
        %165 = vmax.xlane.f32.xlu0 %v164
        %v166 = vpop.xlane.xlu0 %165
        %v167 = vmax.f32 %v140, %v141
        %168 = vmax.xlane.f32.xlu0 %v167
        %v169 = vpop.xlane.xlu0 %168
        %v170 = vmax.f32 %v142, %v143
        %171 = vmax.xlane.f32.xlu0 %v170
        %v172 = vpop.xlane.xlu0 %171
        %v173 = vmax.f32 %v144, %v145
        %174 = vmax.xlane.f32.xlu0 %v173
        %v175 = vpop.xlane.xlu0 %174
        %v176 = vmax.f32 %v146, %v147
        %177 = vmax.xlane.f32.xlu0 %v176
        %v178 = vpop.xlane.xlu0 %177
        %v179 = vmax.f32 %v148, %v149
        %180 = vmax.xlane.f32.xlu0 %v179
        %v181 = vpop.xlane.xlu0 %180
        %v182 = vmax.f32 %v150, %v151
        %183 = vmax.xlane.f32.xlu0 %v182
        %v184 = vpop.xlane.xlu0 %183
        %v185 = vmax.f32 %v152, %v153
        %186 = vmax.xlane.f32.xlu0 %v185
        %v187 = vpop.xlane.xlu0 %186
        %v188 = vmax.f32 %v154, %v155
        %189 = vmax.xlane.f32.xlu0 %v188
        %v190 = vpop.xlane.xlu0 %189
        %v191 = vmax.f32 %v156, %v157
        %192 = vmax.xlane.f32.xlu0 %v191
        %v193 = vpop.xlane.xlu0 %192
        %v194 = vmax.f32 %v158, %v159
        %195 = vmax.xlane.f32.xlu0 %v194
        %v196 = vpop.xlane.xlu0 %195
        %v197 = vmax.f32 %v160, %v161
        %198 = vmax.xlane.f32.xlu0 %v197
        %v199 = vpop.xlane.xlu0 %198
        %v200 = vmax.f32 %v162, %v163
        %201 = vmax.xlane.f32.xlu0 %v200
        %v202 = vpop.xlane.xlu0 %201
        %v203 = vsub.f32 %v138, %v166
        %v204 = vsub.f32 %v139, %v166
        %v205 = vsub.f32 %v140, %v169
        %v206 = vsub.f32 %v141, %v169
        %v207 = vsub.f32 %v142, %v172
        %v208 = vsub.f32 %v143, %v172
        %v209 = vsub.f32 %v144, %v175
        %v210 = vsub.f32 %v145, %v175
        %v211 = vsub.f32 %v146, %v178
        %v212 = vsub.f32 %v147, %v178
        %v213 = vsub.f32 %v148, %v181
        %v214 = vsub.f32 %v149, %v181
        %v215 = vsub.f32 %v150, %v184
        %v216 = vsub.f32 %v151, %v184
        %v217 = vsub.f32 %v152, %v187
        %v218 = vsub.f32 %v153, %v187
        %v219 = vsub.f32 %v154, %v190
        %v220 = vsub.f32 %v155, %v190
        %v221 = vsub.f32 %v156, %v193
        %v222 = vsub.f32 %v157, %v193
        %v223 = vsub.f32 %v158, %v196
        %v224 = vsub.f32 %v159, %v196
        %v225 = vsub.f32 %v160, %v199
        %v226 = vsub.f32 %v161, %v199
        %v227 = vsub.f32 %v162, %v202
        %v228 = vsub.f32 %v163, %v202
        %v229 = vmul.f32 %v203, 1.442695
        %v230 = vpow.pop %v229
        %v231 = vmul.f32 %v204, 1.442695
        %v232 = vpow.pop %v231
        %v233 = vmul.f32 %v205, 1.442695
        %v234 = vpow.pop %v233
        %v235 = vmul.f32 %v206, 1.442695
        %v236 = vpow.pop %v235
        %v237 = vmul.f32 %v207, 1.442695
        %v238 = vpow.pop %v237
        %v239 = vmul.f32 %v208, 1.442695
        %v240 = vpow.pop %v239
        %v241 = vmul.f32 %v209, 1.442695
        %v242 = vpow.pop %v241
        %v243 = vmul.f32 %v210, 1.442695
        %v244 = vpow.pop %v243
        %v245 = vmul.f32 %v211, 1.442695
        %v246 = vpow.pop %v245
        %v247 = vmul.f32 %v212, 1.442695
        %v248 = vpow.pop %v247
        %v249 = vmul.f32 %v213, 1.442695
        %v250 = vpow.pop %v249
        %v251 = vmul.f32 %v214, 1.442695
        %v252 = vpow.pop %v251
        %v253 = vmul.f32 %v215, 1.442695
        %v254 = vpow.pop %v253
        %v255 = vmul.f32 %v216, 1.442695
        %v256 = vpow.pop %v255
        %v257 = vmul.f32 %v217, 1.442695
        %v258 = vpow.pop %v257
        %v259 = vmul.f32 %v218, 1.442695
        %v260 = vpow.pop %v259
        %v261 = vmul.f32 %v219, 1.442695
        %v262 = vpow.pop %v261
        %v263 = vmul.f32 %v220, 1.442695
        %v264 = vpow.pop %v263
        %v265 = vmul.f32 %v221, 1.442695
        %v266 = vpow.pop %v265
        %v267 = vmul.f32 %v222, 1.442695
        %v268 = vpow.pop %v267
        %v269 = vmul.f32 %v223, 1.442695
        %v270 = vpow.pop %v269
        %v271 = vmul.f32 %v224, 1.442695
        %v272 = vpow.pop %v271
        %v273 = vmul.f32 %v225, 1.442695
        %v274 = vpow.pop %v273
        %v275 = vmul.f32 %v226, 1.442695
        %v276 = vpow.pop %v275
        %v277 = vmul.f32 %v227, 1.442695
        %v278 = vpow.pop %v277
        %v279 = vmul.f32 %v228, 1.442695
        %v280 = vpow.pop %v279
        %v281 = vadd.f32 %v230, %v232
        %282 = vadd.xlane.f32.xlu0 %v281
        %v283 = vpop.xlane.xlu0 %282
        %v284 = vadd.f32 %v234, %v236
        %285 = vadd.xlane.f32.xlu0 %v284
        %v286 = vpop.xlane.xlu0 %285
        %v287 = vadd.f32 %v238, %v240
        %288 = vadd.xlane.f32.xlu0 %v287
        %v289 = vpop.xlane.xlu0 %288
        %v290 = vadd.f32 %v242, %v244
        %291 = vadd.xlane.f32.xlu0 %v290
        %v292 = vpop.xlane.xlu0 %291
        %v293 = vadd.f32 %v246, %v248
        %294 = vadd.xlane.f32.xlu0 %v293
        %v295 = vpop.xlane.xlu0 %294
        %v296 = vadd.f32 %v250, %v252
        %297 = vadd.xlane.f32.xlu0 %v296
        %v298 = vpop.xlane.xlu0 %297
        %v299 = vadd.f32 %v254, %v256
        %300 = vadd.xlane.f32.xlu0 %v299
        %v301 = vpop.xlane.xlu0 %300
        %v302 = vadd.f32 %v258, %v260
        %303 = vadd.xlane.f32.xlu0 %v302
        %v304 = vpop.xlane.xlu0 %303
        %v305 = vadd.f32 %v262, %v264
        %306 = vadd.xlane.f32.xlu0 %v305
        %v307 = vpop.xlane.xlu0 %306
        %v308 = vadd.f32 %v266, %v268
        %309 = vadd.xlane.f32.xlu0 %v308
        %v310 = vpop.xlane.xlu0 %309
        %v311 = vadd.f32 %v270, %v272
        %312 = vadd.xlane.f32.xlu0 %v311
        %v313 = vpop.xlane.xlu0 %312
        %v314 = vadd.f32 %v274, %v276
        %315 = vadd.xlane.f32.xlu0 %v314
        %v316 = vpop.xlane.xlu0 %315
        %v317 = vadd.f32 %v278, %v280
        %318 = vadd.xlane.f32.xlu0 %v317
        %v319 = vpop.xlane.xlu0 %318
        %v320 = vlog2.pop %v283
        %v321 = vmul.f32 %v320, 0.6931472
        %v322 = vlog2.pop %v286
        %v323 = vmul.f32 %v322, 0.6931472
        %v324 = vlog2.pop %v289
        %v325 = vmul.f32 %v324, 0.6931472
        %v326 = vlog2.pop %v292
        %v327 = vmul.f32 %v326, 0.6931472
        %v328 = vlog2.pop %v295
        %v329 = vmul.f32 %v328, 0.6931472
        %v330 = vlog2.pop %v298
        %v331 = vmul.f32 %v330, 0.6931472
        %v332 = vlog2.pop %v301
        %v333 = vmul.f32 %v332, 0.6931472
        %v334 = vlog2.pop %v304
        %v335 = vmul.f32 %v334, 0.6931472
        %v336 = vlog2.pop %v307
        %v337 = vmul.f32 %v336, 0.6931472
        %v338 = vlog2.pop %v310
        %v339 = vmul.f32 %v338, 0.6931472
        %v340 = vlog2.pop %v313
        %v341 = vmul.f32 %v340, 0.6931472
        %v342 = vlog2.pop %v316
        %v343 = vmul.f32 %v342, 0.6931472
        %v344 = vlog2.pop %v319
        %v345 = vmul.f32 %v344, 0.6931472
        %v346 = vsub.f32 %v203, %v321
        %v347 = vsub.f32 %v204, %v321
        %v348 = vsub.f32 %v205, %v323
        %v349 = vsub.f32 %v206, %v323
        %v350 = vsub.f32 %v207, %v325
        %v351 = vsub.f32 %v208, %v325
        %v352 = vsub.f32 %v209, %v327
        %v353 = vsub.f32 %v210, %v327
        %v354 = vsub.f32 %v211, %v329
        %v355 = vsub.f32 %v212, %v329
        %v356 = vsub.f32 %v213, %v331
        %v357 = vsub.f32 %v214, %v331
        %v358 = vsub.f32 %v215, %v333
        %v359 = vsub.f32 %v216, %v333
        %v360 = vsub.f32 %v217, %v335
        %v361 = vsub.f32 %v218, %v335
        %v362 = vsub.f32 %v219, %v337
        %v363 = vsub.f32 %v220, %v337
        %v364 = vsub.f32 %v221, %v339
        %v365 = vsub.f32 %v222, %v339
        %v366 = vsub.f32 %v223, %v341
        %v367 = vsub.f32 %v224, %v341
        %v368 = vsub.f32 %v225, %v343
        %v369 = vsub.f32 %v226, %v343
        %v370 = vsub.f32 %v227, %v345
        %v371 = vsub.f32 %v228, %v345
        %372 = vst [vmem:[%s135] sm:$0xff] %v346
        %373 = vst [vmem:[%s135 + $0x8] sm:$0xff] %v347
        %374 = vst [vmem:[%s135 + $0x10] sm:$0xff] %v348
        %375 = vst [vmem:[%s135 + $0x18] sm:$0xff] %v349
        %376 = vst [vmem:[%s135 + $0x20] sm:$0xff] %v350
        %377 = vst [vmem:[%s135 + $0x28] sm:$0xff] %v351
        %378 = vst [vmem:[%s135 + $0x30] sm:$0xff] %v352
        %379 = vst [vmem:[%s135 + $0x38] sm:$0xff] %v353
        %380 = vst [vmem:[%s135 + $0x40] sm:$0xff] %v354
        %381 = vst [vmem:[%s135 + $0x48] sm:$0xff] %v355
        %382 = vst [vmem:[%s135 + $0x50] sm:$0xff] %v356
        %383 = vst [vmem:[%s135 + $0x58] sm:$0xff] %v357
        %384 = vst [vmem:[%s135 + $0x60] sm:$0xff] %v358
        %385 = vst [vmem:[%s135 + $0x68] sm:$0xff] %v359
        %386 = vst [vmem:[%s135 + $0x70] sm:$0xff] %v360
        %387 = vst [vmem:[%s135 + $0x78] sm:$0xff] %v361
        %388 = vst [vmem:[%s135 + $0x80] sm:$0xff] %v362
        %389 = vst [vmem:[%s135 + $0x88] sm:$0xff] %v363
        %390 = vst [vmem:[%s135 + $0x90] sm:$0xff] %v364
        %391 = vst [vmem:[%s135 + $0x98] sm:$0xff] %v365
        %392 = vst [vmem:[%s135 + $0xa0] sm:$0xff] %v366
        %393 = vst [vmem:[%s135 + $0xa8] sm:$0xff] %v367
        %394 = vst [vmem:[%s135 + $0xb0] sm:$0xff] %v368
        %395 = vst [vmem:[%s135 + $0xb8] sm:$0xff] %v369
        %396 = vst [vmem:[%s135 + $0xc0] sm:$0xff] %v370
        %397 = vst [vmem:[%s135 + $0xc8] sm:$0xff] %v371
        %s398 = sand.u32 %s52, 1
        %s399 = scalar_lea.sflag [#allocation4], %s398
        %s400 = sand.u32 %s52, 1
        %s401 = smul.addr %s400, 208
        %s402 = scalar_lea.vmem [#allocation5], %s401
        // Predicated region
        $region29: #{tpu_custom_call.1} parent=23 // pred_check
          %p403 = pneg %p62
        $region30: #{tpu_custom_call.1} parent=23 // pred_check_branch
          %405 = sbr.rel (%p403) target = $region32
        $region31: #{tpu_custom_call.1} parent=23 // pred_region
          %s406 = smul.u32 13, %s18
          %s408 = ssub.s32 3328, 3328
          %409 = vsyncadd %s399, %s408
          %s410 = smul.addr %s406, 2
          %s411 = smul.addr %s410, 128
          %s412 = scalar_lea.hbm %s1, %s411
          %s413 = sshll.u32 %s402, 4
          %s414 = int_to_ptr.vmem [resolvable:$true] %s413
          %419 = dma.vmem_to_hbm [thread:$0]  %s414, 3328, %s412, %s399, 256, 256, 16
        $region32: #{tpu_custom_call.1} parent=23 // pred_fallthru
          _
      $region24: #{tpu_custom_call.1} parent=5 // pred_fallthru
        _
      %p420 = scmp.le.s32.totalorder 2, %s13
      // Predicated region
      $region33: #{tpu_custom_call.1} parent=5 // pred_check
        %p421 = pneg %p420
      $region34: #{tpu_custom_call.1} parent=5 // pred_check_branch
        %423 = sbr.rel (%p421) target = $region36
      $region35: #{tpu_custom_call.1} parent=5 // pred_region
        %s424 = ssub.s32 %s13, 2
        // Predicated region
        $region37: #{tpu_custom_call.1} parent=35 // pred_check
          %p425 = pneg %p68
        $region38: #{tpu_custom_call.1} parent=35 // pred_check_branch
          %427 = sbr.rel (%p425) target = $region40
        $region39: #{tpu_custom_call.1} parent=35 // pred_region
          %s428 = sand.u32 %s53, 1
          %s429 = scalar_lea.sflag [#allocation4], %s428
          %s430 = sand.u32 %s53, 1
          %s431 = smul.addr %s430, 208
          %s432 = scalar_lea.vmem [#allocation5], %s431
          %433 = dma.done %s429, 3328
        $region40: #{tpu_custom_call.1} parent=35 // pred_fallthru
          _
      $region36: #{tpu_custom_call.1} parent=5 // pred_fallthru
        _
    $region6: #{tpu_custom_call.1} parent=1 // loop_footer
      %s17 = sadd.s32 1, %s13
    $region7: #{tpu_custom_call.1} parent=1 // loop_footer_branch
      %12 = sbr.rel target = $region3
    $region8: #{tpu_custom_call.1} parent=1 // loop_exit
      _
    %434 = vsyncpa [#allocation3], 1
    %s435 = scalar_lea.sflag [#allocation3], 1
    %436 = vsyncpa %s435, 1
    %437 = vsyncpa [#allocation4], 1
    %s438 = scalar_lea.sflag [#allocation4], 1
    %439 = vsyncpa %s438, 1

</llo_original>
